<compile_context>
chip_gen: v6e
topology: v6e:2x2x1
jax: 0.10.0
libtpu: 0.0.40
codegen_flags: <defaults>
</compile_context>

<pallas_src>
import functools

import jax
import jax.numpy as jnp
from jax.experimental import pallas as pl
from jax.experimental.pallas import tpu as pltpu

_EPS = 2.3e-08
_F32 = 4

# Per-pass live f32-equivalent block counts (double-buffered pipeline buffers
# already included — do NOT also halve the budget).
_LIVE_SINGLE = 8   # x,y inputs (2x2) + out (2) + ~2 f32 temps
_LIVE_STATS = 6    # x,y inputs (2x2) + ~2 f32 temps (scratch/outputs are tiny)
_LIVE_APPLY = 5    # x input (2) + out (2) + 1 f32 temp
_VMEM_MARGIN = 8 * 1024 * 1024
_MEGACORE_MIN_BYTES = 4 * 1024 * 1024


# --------------------------------------------------------------------------
# Kernels
# --------------------------------------------------------------------------
def _adain_rowblock_kernel(x_ref, y_ref, o_ref, *, inv_hw):
    """Single-pass kernel: whole spatial extent resident per row block.
    Output emitted in affine form scale*x + bias (no centered temp kept live)."""
    x = x_ref[...].astype(jnp.float32)

    # Style stats first -> (row_tile, 1); y's f32 temp can die here.
    y = y_ref[...].astype(jnp.float32)
    mu_y = jnp.sum(y, axis=-1, keepdims=True) * inv_hw
    sig_y = jnp.sqrt(
        (jnp.sum((y - mu_y) ** 2, axis=-1, keepdims=True) + _EPS) * inv_hw)

    # Content stats; (x - mu_x) is consumed by the reduction only.
    mu_x = jnp.sum(x, axis=-1, keepdims=True) * inv_hw
    inv_sig_x = jax.lax.rsqrt(
        (jnp.sum((x - mu_x) ** 2, axis=-1, keepdims=True) + _EPS) * inv_hw)

    scale = sig_y * inv_sig_x
    bias = mu_y - scale * mu_x
    o_ref[...] = (scale * x + bias).astype(o_ref.dtype)


def _adain_colblock_kernel(x_ref, y_ref, o_ref, *, inv_hw):
    """Single-pass kernel for tiny spatial extents (hw < 128): instances sit
    on the lane axis, the spatial reduction runs over sublanes (axis 0)."""
    x = x_ref[...].astype(jnp.float32)
    y = y_ref[...].astype(jnp.float32)

    mu_y = jnp.sum(y, axis=0, keepdims=True) * inv_hw
    sig_y = jnp.sqrt(
        (jnp.sum((y - mu_y) ** 2, axis=0, keepdims=True) + _EPS) * inv_hw)

    mu_x = jnp.sum(x, axis=0, keepdims=True) * inv_hw
    inv_sig_x = jax.lax.rsqrt(
        (jnp.sum((x - mu_x) ** 2, axis=0, keepdims=True) + _EPS) * inv_hw)

    scale = sig_y * inv_sig_x
    bias = mu_y - scale * mu_x
    o_ref[...] = (scale * x + bias).astype(o_ref.dtype)


def _adain_stats_kernel(x_ref, y_ref, sb_ref, cx, cy, sx, sxx, sy, syy,
                        *, inv_hw, hw, hw_tile):
    """Pass 1 of the large-H*W path: accumulate shifted sums / sums of squares
    over the hw ('arbitrary') grid axis, then emit packed (scale, bias)."""
    k = pl.program_id(1)

    x = x_ref[...].astype(jnp.float32)
    y = y_ref[...].astype(jnp.float32)

    @pl.when(k == 0)
    def _():
        # Per-row shift (first block's mean) keeps the uncentered
        # sum-of-squares accumulation numerically stable.
        inv_tile = 1.0 / float(hw_tile)
        cx[...] = jnp.sum(x, axis=-1, keepdims=True) * inv_tile
        cy[...] = jnp.sum(y, axis=-1, keepdims=True) * inv_tile
        sx[...] = jnp.zeros_like(sx)
        sxx[...] = jnp.zeros_like(sxx)
        sy[...] = jnp.zeros_like(sy)
        syy[...] = jnp.zeros_like(syy)

    xs = x - cx[...]
    ys = y - cy[...]
    if hw % hw_tile:  # mask lane padding of the last partial block
        lane = jax.lax.broadcasted_iota(jnp.int32, x.shape, 1) + k * hw_tile
        valid = lane < hw
        xs = jnp.where(valid, xs, 0.0)
        ys = jnp.where(valid, ys, 0.0)

    sx[...] += jnp.sum(xs, axis=-1, keepdims=True)
    sxx[...] += jnp.sum(xs * xs, axis=-1, keepdims=True)
    sy[...] += jnp.sum(ys, axis=-1, keepdims=True)
    syy[...] += jnp.sum(ys * ys, axis=-1, keepdims=True)

    @pl.when(k == pl.num_programs(1) - 1)
    def _():
        mu_x = cx[...] + sx[...] * inv_hw
        mu_y = cy[...] + sy[...] * inv_hw
        # centered sum of squares from shifted accumulators (shift cancels)
        css_x = jnp.maximum(sxx[...] - sx[...] * sx[...] * inv_hw, 0.0)
        css_y = jnp.maximum(syy[...] - sy[...] * sy[...] * inv_hw, 0.0)
        inv_sig_x = jax.lax.rsqrt((css_x + _EPS) * inv_hw)
        sig_y = jnp.sqrt((css_y + _EPS) * inv_hw)
        scale = sig_y * inv_sig_x
        bias = mu_y - scale * mu_x
        col = jax.lax.broadcasted_iota(jnp.int32, sb_ref.shape, 1)
        sb_ref[...] = jnp.where(col == 0, scale, bias)   # packed (scale, bias)


def _adain_apply_kernel(sb_ref, x_ref, o_ref):
    """Pass 2 of the large-H*W path: out = scale * x + bias (streaming)."""
    sb = sb_ref[...]
    scale = sb[:, 0:1]
    bias = sb[:, 1:2]
    o_ref[...] = (scale * x_ref[...].astype(jnp.float32)
                  + bias).astype(o_ref.dtype)


# --------------------------------------------------------------------------
# Tiling / VMEM budgeting
# --------------------------------------------------------------------------
def _vmem_params():
    """(tile_budget_bytes, vmem_limit_bytes) — generation aware (v7x: 64 MiB)."""
    try:
        cap = int(pltpu.get_tpu_info().vmem_capacity_bytes)
    except Exception:
        cap = 64 * 1024 * 1024  # v7x per-TensorCore VMEM; safe lower bound
    vmem_limit = min(cap * 3 // 4, 100 * 1024 * 1024)   # ~48 MiB v7x, ~96 MiB v5e/v6e
    tile_budget = max(vmem_limit - _VMEM_MARGIN, 4 * 1024 * 1024)
    return tile_budget, vmem_limit


def _round_rows(t, rows):
    """(8,128) rule on the second-last dim: multiple of 8, or the full extent."""
    if t >= rows:
        return rows
    t = max(8, (t // 8) * 8)
    return min(t, rows)


def _cap_for_megacore(row_tile, rows, hw):
    """Force >=2 grid steps on the 'parallel' row axis only when the work is
    big enough for a v7x megacore split to pay for the extra step."""
    if rows >= 16 and rows * hw * _F32 >= _MEGACORE_MIN_BYTES:
        row_tile = min(row_tile, max(8, (pl.cdiv(rows, 2) // 8) * 8))
    return row_tile


# --------------------------------------------------------------------------
# Wrappers around pallas_call
# --------------------------------------------------------------------------
def _single_pass(x2, y2, rows, hw, tile_budget, vmem_limit):
    per_row = hw * _F32 * _LIVE_SINGLE
    row_tile = max(tile_budget // per_row, 1)
    row_tile = min(row_tile, 1024, rows)
    row_tile = _cap_for_megacore(row_tile, rows, hw)
    row_tile = _round_rows(row_tile, rows)

    kernel = functools.partial(_adain_rowblock_kernel, inv_hw=1.0 / float(hw))
    return pl.pallas_call(
        kernel,
        out_shape=jax.ShapeDtypeStruct((rows, hw), x2.dtype),
        grid=(pl.cdiv(rows, row_tile),),
        in_specs=[pl.BlockSpec((row_tile, hw), lambda i: (i, 0)),
                  pl.BlockSpec((row_tile, hw), lambda i: (i, 0))],
        out_specs=pl.BlockSpec((row_tile, hw), lambda i: (i, 0)),
        compiler_params=pltpu.CompilerParams(
            dimension_semantics=("parallel",),
            vmem_limit_bytes=vmem_limit),
    )(x2, y2)


def _single_pass_transposed(x2, y2, rows, hw, tile_budget, vmem_limit):
    """hw < 128: put instances on the lane axis (lane-dense stores)."""
    xT = x2.T  # (hw, rows)
    yT = y2.T

    per_col = hw * _F32 * _LIVE_SINGLE
    row_tile = max(tile_budget // per_col, 1)
    if row_tile >= rows:
        row_tile = rows
    else:
        row_tile = max(128, (row_tile // 128) * 128)
        if row_tile >= rows:
            row_tile = rows

    kernel = functools.partial(_adain_colblock_kernel, inv_hw=1.0 / float(hw))
    outT = pl.pallas_call(
        kernel,
        out_shape=jax.ShapeDtypeStruct((hw, rows), x2.dtype),
        grid=(pl.cdiv(rows, row_tile),),
        in_specs=[pl.BlockSpec((hw, row_tile), lambda i: (0, i)),
                  pl.BlockSpec((hw, row_tile), lambda i: (0, i))],
        out_specs=pl.BlockSpec((hw, row_tile), lambda i: (0, i)),
        compiler_params=pltpu.CompilerParams(
            dimension_semantics=("parallel",),
            vmem_limit_bytes=vmem_limit),
    )(xT, yT)
    return outT.T


def _two_pass(x2, y2, rows, hw, tile_budget, vmem_limit, max_hw_tile):
    row_tile = min(rows, 256)
    row_tile = _cap_for_megacore(row_tile, rows, hw)
    row_tile = _round_rows(row_tile, rows)

    def pick_hw_tile(live_blocks):
        t = tile_budget // (row_tile * _F32 * live_blocks)
        if max_hw_tile is not None:
            t = min(t, max_hw_tile)
        t = max(128, (t // 128) * 128)
        return hw if t >= hw else t

    hw_tile_s = pick_hw_tile(_LIVE_STATS)   # stats pass
    hw_tile_a = pick_hw_tile(_LIVE_APPLY)   # apply pass (fewer live blocks)

    stats_kernel = functools.partial(
        _adain_stats_kernel, inv_hw=1.0 / float(hw), hw=hw, hw_tile=hw_tile_s)

    sb = pl.pallas_call(
        stats_kernel,
        out_shape=jax.ShapeDtypeStruct((rows, 2), jnp.float32),
        grid=(pl.cdiv(rows, row_tile), pl.cdiv(hw, hw_tile_s)),
        in_specs=[pl.BlockSpec((row_tile, hw_tile_s), lambda i, k: (i, k)),
                  pl.BlockSpec((row_tile, hw_tile_s), lambda i, k: (i, k))],
        out_specs=pl.BlockSpec((row_tile, 2), lambda i, k: (i, 0)),
        scratch_shapes=[pltpu.VMEM((row_tile, 1), jnp.float32)] * 6,
        compiler_params=pltpu.CompilerParams(
            dimension_semantics=("parallel", "arbitrary"),
            vmem_limit_bytes=vmem_limit),
    )(x2, y2)

    return pl.pallas_call(
        _adain_apply_kernel,
        out_shape=jax.ShapeDtypeStruct((rows, hw), x2.dtype),
        grid=(pl.cdiv(rows, row_tile), pl.cdiv(hw, hw_tile_a)),
        in_specs=[pl.BlockSpec((row_tile, 2), lambda i, k: (i, 0)),
                  pl.BlockSpec((row_tile, hw_tile_a), lambda i, k: (i, k))],
        out_specs=pl.BlockSpec((row_tile, hw_tile_a), lambda i, k: (i, k)),
        compiler_params=pltpu.CompilerParams(
            dimension_semantics=("parallel", "parallel"),
            vmem_limit_bytes=vmem_limit),
    )(sb, x2)


@functools.partial(jax.jit, static_argnames=("force_two_pass", "max_hw_tile"))
def adain(x, y, *, force_two_pass=False, max_hw_tile=None):
    """x, y: (N, C, H, W) content / style embeddings. Returns (N, C, H, W)."""
    assert x.shape == y.shape, "content and style must share a shape"
    n, c, h, w = x.shape
    rows, hw = n * c, h * w
    x2 = x.reshape(rows, hw)
    y2 = y.reshape(rows, hw)

    tile_budget, vmem_limit = _vmem_params()

    if hw < 128 and not force_two_pass:
        out2 = _single_pass_transposed(x2, y2, rows, hw, tile_budget, vmem_limit)
    else:
        fits_single = hw * _F32 * _LIVE_SINGLE * min(rows, 8) <= tile_budget
        if fits_single and not force_two_pass:
            out2 = _single_pass(x2, y2, rows, hw, tile_budget, vmem_limit)
        else:
            out2 = _two_pass(x2, y2, rows, hw, tile_budget, vmem_limit,
                             max_hw_tile)

    return out2.reshape(n, c, h, w)


# --------------------------------------------------------------------------
# Pure-JAX reference mirroring the PyTorch module exactly
# --------------------------------------------------------------------------
def _adain_ref(x, y):
    hw = x.shape[2] * x.shape[3]
    mu_x = jnp.sum(x, axis=(2, 3)) / hw
    mu_y = jnp.sum(y, axis=(2, 3)) / hw
    sig_x = jnp.sqrt(
        (jnp.sum((x - mu_x[:, :, None, None]) ** 2, axis=(2, 3)) + _EPS) / hw)
    sig_y = jnp.sqrt(
        (jnp.sum((y - mu_y[:, :, None, None]) ** 2, axis=(2, 3)) + _EPS) / hw)
    return (sig_y[:, :, None, None]
            * ((x - mu_x[:, :, None, None]) / sig_x[:, :, None, None])
            + mu_y[:, :, None, None])


if __name__ == "__main__":
    key = jax.random.PRNGKey(0)
    kx, ky = jax.random.split(key)

    # 1) AdaIN at a 16x16 generator stage (single-pass row-block path).
    x = jax.random.normal(kx, (2, 4, 16, 16), dtype=jnp.float32)
    y = 2.5 * jax.random.normal(ky, (2, 4, 16, 16), dtype=jnp.float32) + 0.7
    out = jax.block_until_ready(adain(x, y))
    ref = _adain_ref(x, y)
    assert out.shape == (2, 4, 16, 16)
    assert jnp.allclose(out, ref, atol=1e-5, rtol=1e-5), "single-pass mismatch"

    # 2) generator_style's first AdaIN shape (B=2, ch=64, 4x4): hw=16 < 128
    #    -> lane-transposed path (instances on lanes, spatial on sublanes).
    xg = jax.random.normal(jax.random.PRNGKey(1), (2, 64, 4, 4), jnp.float32)
    yg = 1.5 * jax.random.normal(jax.random.PRNGKey(2), (2, 64, 4, 4),
                                 jnp.float32) - 0.3
    outg = jax.block_until_ready(adain(xg, yg))
    assert jnp.allclose(outg, _adain_ref(xg, yg), atol=1e-5, rtol=1e-5), \
        "transposed-path mismatch"

    # 3) Exercise the large-H*W two-pass path (shifted stats pass + lane-dense
    #    apply pass) on a small shape by forcing it.
    out3 = jax.block_until_ready(
        adain(x, y, force_two_pass=True, max_hw_tile=128))
    assert jnp.allclose(out3, ref, atol=1e-4, rtol=1e-4), "two-pass mismatch"

    print("KERNEL_OK")
</pallas_src>

<mosaic_0001>
module attributes {stable_mosaic.version = 11 : i64} {
  func.func @_adain_rowblock_kernel(%arg0: i32, %arg1: memref<8x256xf32, #tpu.memory_space<vmem>>, %arg2: memref<8x256xf32, #tpu.memory_space<vmem>>, %arg3: memref<8x256xf32, #tpu.memory_space<vmem>>) attributes {dimension_semantics = [#tpu.dimension_semantics<parallel>], iteration_bounds = array<i64: 1>, scalar_prefetch = 0 : i64, scratch_operands = 0 : i64, tpu.core_type = #tpu.core_type<tc>, window_params = [{transform_indices = @transform_0, window_bounds = array<i64: 8, 256>}, {transform_indices = @transform_1, window_bounds = array<i64: 8, 256>}, {transform_indices = @transform_2, window_bounds = array<i64: 8, 256>}]} {
    %c0 = arith.constant 0 : index
    %c0_0 = arith.constant 0 : index
    %0 = vector.load %arg1[%c0, %c0_0] : memref<8x256xf32, #tpu.memory_space<vmem>>, vector<8x256xf32>
    %c0_1 = arith.constant 0 : index
    %c0_2 = arith.constant 0 : index
    %1 = vector.load %arg2[%c0_1, %c0_2] : memref<8x256xf32, #tpu.memory_space<vmem>>, vector<8x256xf32>
    %cst = arith.constant dense<0.000000e+00> : vector<8xf32>
    %2 = vector.multi_reduction <add>, %1, %cst [1] : vector<8x256xf32> to vector<8xf32>
    %3 = vector.shape_cast %2 : vector<8xf32> to vector<8x1xf32>
    %cst_3 = arith.constant 3.906250e-03 : f32
    %4 = vector.broadcast %cst_3 : f32 to vector<8x1xf32>
    %5 = arith.mulf %3, %4 : vector<8x1xf32>
    %6 = vector.broadcast %5 : vector<8x1xf32> to vector<8x256xf32>
    %7 = arith.subf %1, %6 : vector<8x256xf32>
    %8 = arith.mulf %7, %7 : vector<8x256xf32>
    %cst_4 = arith.constant dense<0.000000e+00> : vector<8xf32>
    %9 = vector.multi_reduction <add>, %8, %cst_4 [1] : vector<8x256xf32> to vector<8xf32>
    %10 = vector.shape_cast %9 : vector<8xf32> to vector<8x1xf32>
    %cst_5 = arith.constant 2.300000e-08 : f32
    %11 = vector.broadcast %cst_5 : f32 to vector<8x1xf32>
    %12 = arith.addf %10, %11 : vector<8x1xf32>
    %cst_6 = arith.constant 3.906250e-03 : f32
    %13 = vector.broadcast %cst_6 : f32 to vector<8x1xf32>
    %14 = arith.mulf %12, %13 : vector<8x1xf32>
    %15 = math.sqrt %14 : vector<8x1xf32>
    %cst_7 = arith.constant dense<0.000000e+00> : vector<8xf32>
    %16 = vector.multi_reduction <add>, %0, %cst_7 [1] : vector<8x256xf32> to vector<8xf32>
    %17 = vector.shape_cast %16 : vector<8xf32> to vector<8x1xf32>
    %cst_8 = arith.constant 3.906250e-03 : f32
    %18 = vector.broadcast %cst_8 : f32 to vector<8x1xf32>
    %19 = arith.mulf %17, %18 : vector<8x1xf32>
    %20 = vector.broadcast %19 : vector<8x1xf32> to vector<8x256xf32>
    %21 = arith.subf %0, %20 : vector<8x256xf32>
    %22 = arith.mulf %21, %21 : vector<8x256xf32>
    %cst_9 = arith.constant dense<0.000000e+00> : vector<8xf32>
    %23 = vector.multi_reduction <add>, %22, %cst_9 [1] : vector<8x256xf32> to vector<8xf32>
    %24 = vector.shape_cast %23 : vector<8xf32> to vector<8x1xf32>
    %cst_10 = arith.constant 2.300000e-08 : f32
    %25 = vector.broadcast %cst_10 : f32 to vector<8x1xf32>
    %26 = arith.addf %24, %25 : vector<8x1xf32>
    %cst_11 = arith.constant 3.906250e-03 : f32
    %27 = vector.broadcast %cst_11 : f32 to vector<8x1xf32>
    %28 = arith.mulf %26, %27 : vector<8x1xf32>
    %29 = math.rsqrt %28 : vector<8x1xf32>
    %30 = arith.mulf %15, %29 : vector<8x1xf32>
    %31 = arith.mulf %30, %19 : vector<8x1xf32>
    %32 = arith.subf %5, %31 : vector<8x1xf32>
    %33 = vector.broadcast %30 : vector<8x1xf32> to vector<8x256xf32>
    %34 = arith.mulf %33, %0 : vector<8x256xf32>
    %35 = vector.broadcast %32 : vector<8x1xf32> to vector<8x256xf32>
    %36 = arith.addf %34, %35 : vector<8x256xf32>
    %c0_12 = arith.constant 0 : index
    %c0_13 = arith.constant 0 : index
    %37 = vector.load %arg3[%c0_12, %c0_13] : memref<8x256xf32, #tpu.memory_space<vmem>>, vector<8x256xf32>
    tpu.vector_store %arg3[%c0_12, %c0_13], %36 {strides = array<i32>} : memref<8x256xf32, #tpu.memory_space<vmem>>, vector<8x256xf32>,
    return
  }
  func.func @transform_0(%arg0: i32) -> (i32, i32) {
    %c0_i32 = arith.constant 0 : i32
    %c0_i32_0 = arith.constant 0 : i32
    return %arg0, %c0_i32 : i32, i32
  }
  func.func @transform_1(%arg0: i32) -> (i32, i32) {
    %c0_i32 = arith.constant 0 : i32
    %c0_i32_0 = arith.constant 0 : i32
    return %arg0, %c0_i32 : i32, i32
  }
  func.func @transform_2(%arg0: i32) -> (i32, i32) {
    %c0_i32 = arith.constant 0 : i32
    %c0_i32_0 = arith.constant 0 : i32
    return %arg0, %c0_i32 : i32, i32
  }
}

</mosaic_0001>

<llo_original>
// kernel: adain.1
$region0: #{adain.1}
  #allocation0 [shape = 'u32[]', space=smem, size = 0x4, offset = 0x4, fixed_abs, tag = 'smem constant byte address 0x4 - core index']
  #allocation1 [shape = 'u32[144,128]{1,0:T(1,128)}', space=vmem, size = 0x12000, scoped, tag = 'internal scratch']
  %s0 = inlined_call_operand.vmem [shape: f32[8,256], index: 0, kind: input, shape index: {}]
  %s1 = inlined_call_operand.vmem [shape: f32[8,256], index: 1, kind: input, shape index: {}]
  %s2 = inlined_call_operand.vmem [shape: f32[8,256], index: 2, kind: output, shape index: {}]
  %s3 = sld [smem:[#allocation0]]
  $region18: #{adain.1} parent=0
    _
  %s5 = ssub.s32 1, %s3
  %s6 = scalar_select 0, %s5, %s3
  // Predicated region
  $region2: #{adain.1} parent=0 // pred_check
    _
  $region3: #{adain.1} parent=0 // pred_check_branch
    %8 = sbr.rel (0) target = $region5
  $region4: #{adain.1} parent=0 // pred_region
    _
  $region5: #{adain.1} parent=0 // pred_fallthru
    _
  // Predicated region
  $region6: #{adain.1} parent=0 // pred_check
    _
  $region7: #{adain.1} parent=0 // pred_check_branch
    %10 = sbr.rel (0) target = $region9
  $region8: #{adain.1} parent=0 // pred_region
    _
  $region9: #{adain.1} parent=0 // pred_fallthru
    _
  %v11 = vld [vmem:[%s0] sm:$0xff]
  %v12 = vld [vmem:[%s0 + $0x8] sm:$0xff]
  %v13 = vld [vmem:[%s1] sm:$0xff]
  %v14 = vld [vmem:[%s1 + $0x8] sm:$0xff]
  %v15 = vadd.f32 %v13, %v14
  %16 = vadd.xlane.f32.xlu0 %v15
  %v17 = vpop.xlane.xlu0 %16
  %v18 = vmul.f32 %v17, 0.00390625
  %v19 = vsub.f32 %v13, %v18
  %v20 = vsub.f32 %v14, %v18
  %v21 = vmul.f32 %v19, %v19
  %v22 = vmul.f32 %v20, %v20
  %v23 = vadd.f32 %v21, %v22
  %24 = vadd.xlane.f32.xlu0 %v23
  %v25 = vpop.xlane.xlu0 %24
  %v26 = vadd.f32 %v25, 2.3e-08
  %v27 = vmul.f32 %v26, 0.00390625
  %v28 = vrsqrt.pop %v27
  %v29 = vmul.f32 %v27, %v28
  %vm30 = vcmp.eq.f32.partialorder %v27, inf
  %v31 = vsel %vm30, %v27, %v29
  %vm32 = vcmp.eq.f32.partialorder %v27, 0.0
  %v33 = vand.u32 %v27, 2147483648
  %v34 = vsel %vm32, %v33, %v31
  %v35 = vadd.f32 %v11, %v12
  %36 = vadd.xlane.f32.xlu0 %v35
  %v37 = vpop.xlane.xlu0 %36
  %v38 = vmul.f32 %v37, 0.00390625
  %v39 = vsub.f32 %v11, %v38
  %v40 = vsub.f32 %v12, %v38
  %v41 = vmul.f32 %v39, %v39
  %v42 = vmul.f32 %v40, %v40
  %v43 = vadd.f32 %v41, %v42
  %44 = vadd.xlane.f32.xlu0 %v43
  %v45 = vpop.xlane.xlu0 %44
  %v46 = vadd.f32 %v45, 2.3e-08
  %v47 = vmul.f32 %v46, 0.00390625
  %v48 = vrsqrt.pop %v47
  %v49 = vmul.f32 %v34, %v48
  %v50 = vmul.f32 %v49, %v38
  %v51 = vsub.f32 %v18, %v50
  %v52 = vmul.f32 %v49, %v11
  %v53 = vmul.f32 %v49, %v12
  %v54 = vadd.f32 %v52, %v51
  %v55 = vadd.f32 %v53, %v51
  %56 = vst [vmem:[%s2] sm:$0xff] %v54
  %57 = vst [vmem:[%s2 + $0x8] sm:$0xff] %v55
  // Predicated region
  $region10: #{adain.1} parent=0 // pred_check
    _
  $region11: #{adain.1} parent=0 // pred_check_branch
    %59 = sbr.rel (0) target = $region13
  $region12: #{adain.1} parent=0 // pred_region
    _
  $region13: #{adain.1} parent=0 // pred_fallthru
    _
  // Predicated region
  $region14: #{adain.1} parent=0 // pred_check
    _
  $region15: #{adain.1} parent=0 // pred_check_branch
    %61 = sbr.rel (0) target = $region17
  $region16: #{adain.1} parent=0 // pred_region
    _
  $region17: #{adain.1} parent=0 // pred_fallthru
    _

</llo_original>
